<compile_context>
chip_gen: v6e
topology: v6e:2x2x1
jax: 0.10.0
libtpu: 0.0.40
codegen_flags: <defaults>
</compile_context>

<pallas_src>
import jax
import jax.numpy as jnp
from jax.experimental import pallas as pl
from jax.experimental.pallas import tpu as pltpu


def _heade_kernel(x_ref, s1_ref, b1_ref, w_ref, fcb_ref, s2_ref, b2_ref,
                  out_ref, acc_ref):
    k = pl.program_id(2)

    @pl.when(k == 0)
    def _():
        acc_ref[...] = jnp.zeros_like(acc_ref)

    # BN1 (eval-mode affine, folded to scale/bias). Dropout(0.4) == identity
    # in eval mode.
    xn = x_ref[...] * s1_ref[...] + b1_ref[...]

    # Single MXU matmul per K tile: bf16 operands, f32 accumulation in VMEM.
    acc_ref[...] += jnp.dot(xn.astype(jnp.bfloat16), w_ref[...],
                            preferred_element_type=jnp.float32)

    # Epilogue at the last reduction step: Linear bias + BN2 (affine=False).
    @pl.when(k == pl.num_programs(2) - 1)
    def _():
        out_ref[...] = ((acc_ref[...] + fcb_ref[...]) * s2_ref[...]
                        + b2_ref[...]).astype(out_ref.dtype)


def _pick_tile(dim, prefs):
    """Largest preferred tile that divides `dim`, else the full dim (small case)."""
    for p in prefs:
        if p <= dim and dim % p == 0:
            return p
    return dim


def head_e(x, params, *, tm=None, tn=None, tk=None):
    """Eval-mode HeadE forward. x: any shape (B, ...); flattened to (B, K)."""
    B = x.shape[0]
    x2 = x.reshape(B, -1)                      # input.view(B, -1)
    M, K = x2.shape
    Kw, N = params["w"].shape
    assert K == Kw, (K, Kw)

    # Tile sizes: lane-dense (multiples of 128) where possible, else full dim.
    tm = tm or _pick_tile(M, (256, 128, 64, 32, 16, 8))
    tn = tn or _pick_tile(N, (512, 256, 128))
    tk = tk or _pick_tile(K, (512, 256, 128))
    grid = (M // tm, N // tn, K // tk)

    # Per-feature BN / bias vectors as lane-dense (1, dim) slabs.
    s1 = params["s1"].reshape(1, K).astype(jnp.float32)
    b1 = params["b1"].reshape(1, K).astype(jnp.float32)
    fcb = params["fc_b"].reshape(1, N).astype(jnp.float32)
    s2 = params["s2"].reshape(1, N).astype(jnp.float32)
    b2 = params["b2"].reshape(1, N).astype(jnp.float32)
    w = params["w"]                            # (K, N), bf16

    return pl.pallas_call(
        _heade_kernel,
        out_shape=jax.ShapeDtypeStruct((M, N), jnp.float32),
        grid_spec=pltpu.PrefetchScalarGridSpec(
            num_scalar_prefetch=0,
            grid=grid,
            in_specs=[
                pl.BlockSpec((tm, tk), lambda i, j, k: (i, k)),   # x
                pl.BlockSpec((1, tk), lambda i, j, k: (0, k)),    # BN1 scale
                pl.BlockSpec((1, tk), lambda i, j, k: (0, k)),    # BN1 bias
                pl.BlockSpec((tk, tn), lambda i, j, k: (k, j)),   # W (bf16)
                pl.BlockSpec((1, tn), lambda i, j, k: (0, j)),    # fc bias
                pl.BlockSpec((1, tn), lambda i, j, k: (0, j)),    # BN2 scale
                pl.BlockSpec((1, tn), lambda i, j, k: (0, j)),    # BN2 bias
            ],
            out_specs=pl.BlockSpec((tm, tn), lambda i, j, k: (i, j)),
            scratch_shapes=[pltpu.VMEM((tm, tn), jnp.float32)],
        ),
        compiler_params=pltpu.CompilerParams(
            dimension_semantics=("parallel", "parallel", "arbitrary"),
            vmem_limit_bytes=32 * 1024 * 1024,
        ),
    )(x2, s1, b1, w, fcb, s2, b2)


def _fold_bn_affine(gamma, beta, mean, var, eps=1e-5):
    scale = gamma * jax.lax.rsqrt(var + eps)
    return scale, beta - mean * scale


def _fold_bn_noaffine(mean, var, eps=1e-5):
    scale = jax.lax.rsqrt(var + eps)
    return scale, -mean * scale


if __name__ == "__main__":
    # Small shapes consistent with the module: B=2, features 4x16x16 -> 1024,
    # emb_size=128.
    B, C, Hs, Ws = 2, 4, 16, 16
    input_size = C * Hs * Ws
    emb_size = 128

    key = jax.random.PRNGKey(0)
    ks = jax.random.split(key, 9)

    x = jax.random.normal(ks[0], (B, C, Hs, Ws), jnp.float32)

    # BN1 (affine, running stats).
    g1 = 1.0 + 0.1 * jax.random.normal(ks[1], (input_size,), jnp.float32)
    be1 = 0.1 * jax.random.normal(ks[2], (input_size,), jnp.float32)
    m1 = 0.1 * jax.random.normal(ks[3], (input_size,), jnp.float32)
    v1 = 1.0 + 0.1 * jax.random.uniform(ks[4], (input_size,), jnp.float32)
    s1, b1 = _fold_bn_affine(g1, be1, m1, v1)

    # Linear(input_size, emb_size): weight stored (K, N) for x @ W.
    w_f32 = jax.random.normal(ks[5], (input_size, emb_size), jnp.float32) \
        / jnp.sqrt(jnp.float32(input_size))
    fc_b = 0.1 * jax.random.normal(ks[6], (emb_size,), jnp.float32)

    # BN2 (affine=False, running stats).
    m2 = 0.1 * jax.random.normal(ks[7], (emb_size,), jnp.float32)
    v2 = 1.0 + 0.1 * jax.random.uniform(ks[8], (emb_size,), jnp.float32)
    s2, b2 = _fold_bn_noaffine(m2, v2)

    params = dict(s1=s1, b1=b1, w=w_f32.astype(jnp.bfloat16),
                  fc_b=fc_b, s2=s2, b2=b2)

    out = jax.block_until_ready(head_e(x, params))

    # Pure-JAX reference (eval-mode module semantics, same bf16 weights).
    xf = x.reshape(B, -1)
    h = xf * s1 + b1
    h = jnp.dot(h, params["w"].astype(jnp.float32),
                precision=jax.lax.Precision.HIGHEST) + fc_b
    ref = h * s2 + b2
    ref = jax.block_until_ready(ref)

    assert out.shape == (B, emb_size)
    max_err = float(jnp.max(jnp.abs(out - ref)))
    assert jnp.allclose(out, ref, atol=2e-2, rtol=2e-2), max_err

    print("KERNEL_OK")
</pallas_src>

<mosaic_0001>
module attributes {stable_mosaic.version = 11 : i64} {
  func.func @_heade_kernel(%arg0: i32, %arg1: i32, %arg2: i32, %arg3: memref<2x512xf32, #tpu.memory_space<vmem>>, %arg4: memref<1x512xf32, #tpu.memory_space<vmem>>, %arg5: memref<1x512xf32, #tpu.memory_space<vmem>>, %arg6: memref<512x128xbf16, #tpu.memory_space<vmem>>, %arg7: memref<1x128xf32, #tpu.memory_space<vmem>>, %arg8: memref<1x128xf32, #tpu.memory_space<vmem>>, %arg9: memref<1x128xf32, #tpu.memory_space<vmem>>, %arg10: memref<2x128xf32, #tpu.memory_space<vmem>>, %arg11: memref<2x128xf32, #tpu.memory_space<vmem>>) attributes {dimension_semantics = [#tpu.dimension_semantics<parallel>, #tpu.dimension_semantics<parallel>, #tpu.dimension_semantics<arbitrary>], iteration_bounds = array<i64: 1, 1, 2>, scalar_prefetch = 0 : i64, scratch_operands = 1 : i64, tpu.core_type = #tpu.core_type<tc>, window_params = [{transform_indices = @transform_0, window_bounds = array<i64: 2, 512>}, {transform_indices = @transform_1, window_bounds = array<i64: 1, 512>}, {transform_indices = @transform_2, window_bounds = array<i64: 1, 512>}, {transform_indices = @transform_3, window_bounds = array<i64: 512, 128>}, {transform_indices = @transform_4, window_bounds = array<i64: 1, 128>}, {transform_indices = @transform_5, window_bounds = array<i64: 1, 128>}, {transform_indices = @transform_6, window_bounds = array<i64: 1, 128>}, {transform_indices = @transform_7, window_bounds = array<i64: 2, 128>}]} {
    %c0_i32 = arith.constant 0 : i32
    %0 = arith.cmpi eq, %arg2, %c0_i32 : i32
    %1 = arith.extui %0 : i1 to i32
    %c0_i32_0 = arith.constant 0 : i32
    %2 = arith.cmpi ne, %1, %c0_i32_0 : i32
    scf.if %2 {
      %cst_13 = arith.constant 0.000000e+00 : f32
      %19 = vector.broadcast %cst_13 : f32 to vector<2x128xf32>
      %c0_14 = arith.constant 0 : index
      %c0_15 = arith.constant 0 : index
      %20 = vector.load %arg11[%c0_14, %c0_15] : memref<2x128xf32, #tpu.memory_space<vmem>>, vector<2x128xf32>
      tpu.vector_store %arg11[%c0_14, %c0_15], %19 {strides = array<i32>} : memref<2x128xf32, #tpu.memory_space<vmem>>, vector<2x128xf32>,
    } else {
    }
    %c0 = arith.constant 0 : index
    %c0_1 = arith.constant 0 : index
    %3 = vector.load %arg3[%c0, %c0_1] : memref<2x512xf32, #tpu.memory_space<vmem>>, vector<2x512xf32>
    %c0_2 = arith.constant 0 : index
    %c0_3 = arith.constant 0 : index
    %4 = vector.load %arg4[%c0_2, %c0_3] : memref<1x512xf32, #tpu.memory_space<vmem>>, vector<1x512xf32>
    %5 = vector.broadcast %4 : vector<1x512xf32> to vector<2x512xf32>
    %6 = arith.mulf %3, %5 : vector<2x512xf32>
    %c0_4 = arith.constant 0 : index
    %c0_5 = arith.constant 0 : index
    %7 = vector.load %arg5[%c0_4, %c0_5] : memref<1x512xf32, #tpu.memory_space<vmem>>, vector<1x512xf32>
    %8 = vector.broadcast %7 : vector<1x512xf32> to vector<2x512xf32>
    %9 = arith.addf %6, %8 : vector<2x512xf32>
    %c0_6 = arith.constant 0 : index
    %c0_7 = arith.constant 0 : index
    %10 = vector.load %arg11[%c0_6, %c0_7] : memref<2x128xf32, #tpu.memory_space<vmem>>, vector<2x128xf32>
    %11 = arith.truncf %9 : vector<2x512xf32> to vector<2x512xbf16>
    %c0_8 = arith.constant 0 : index
    %c0_9 = arith.constant 0 : index
    %12 = vector.load %arg6[%c0_8, %c0_9] : memref<512x128xbf16, #tpu.memory_space<vmem>>, vector<512x128xbf16>
    %cst = arith.constant dense<0.000000e+00> : vector<2x128xf32>
    %13 = tpu.matmul %11, %12, %cst {dimension_numbers = #tpu.dot_dimension_numbers<[1], [0], [0], [1], [0, 0, 1, 1], [], []>} : vector<2x512xbf16>, vector<512x128xbf16>, vector<2x128xf32> -> vector<2x128xf32>
    %14 = arith.addf %10, %13 : vector<2x128xf32>
    %c0_10 = arith.constant 0 : index
    %c0_11 = arith.constant 0 : index
    %15 = vector.load %arg11[%c0_10, %c0_11] : memref<2x128xf32, #tpu.memory_space<vmem>>, vector<2x128xf32>
    tpu.vector_store %arg11[%c0_10, %c0_11], %14 {strides = array<i32>} : memref<2x128xf32, #tpu.memory_space<vmem>>, vector<2x128xf32>,
    %c1_i32 = arith.constant 1 : i32
    %16 = arith.cmpi eq, %arg2, %c1_i32 : i32
    %17 = arith.extui %16 : i1 to i32
    %c0_i32_12 = arith.constant 0 : i32
    %18 = arith.cmpi ne, %17, %c0_i32_12 : i32
    scf.if %18 {
      %c0_13 = arith.constant 0 : index
      %c0_14 = arith.constant 0 : index
      %19 = vector.load %arg11[%c0_13, %c0_14] : memref<2x128xf32, #tpu.memory_space<vmem>>, vector<2x128xf32>
      %c0_15 = arith.constant 0 : index
      %c0_16 = arith.constant 0 : index
      %20 = vector.load %arg7[%c0_15, %c0_16] : memref<1x128xf32, #tpu.memory_space<vmem>>, vector<1x128xf32>
      %21 = vector.broadcast %20 : vector<1x128xf32> to vector<2x128xf32>
      %22 = arith.addf %19, %21 : vector<2x128xf32>
      %c0_17 = arith.constant 0 : index
      %c0_18 = arith.constant 0 : index
      %23 = vector.load %arg8[%c0_17, %c0_18] : memref<1x128xf32, #tpu.memory_space<vmem>>, vector<1x128xf32>
      %24 = vector.broadcast %23 : vector<1x128xf32> to vector<2x128xf32>
      %25 = arith.mulf %22, %24 : vector<2x128xf32>
      %c0_19 = arith.constant 0 : index
      %c0_20 = arith.constant 0 : index
      %26 = vector.load %arg9[%c0_19, %c0_20] : memref<1x128xf32, #tpu.memory_space<vmem>>, vector<1x128xf32>
      %27 = vector.broadcast %26 : vector<1x128xf32> to vector<2x128xf32>
      %28 = arith.addf %25, %27 : vector<2x128xf32>
      %c0_21 = arith.constant 0 : index
      %c0_22 = arith.constant 0 : index
      %29 = vector.load %arg10[%c0_21, %c0_22] : memref<2x128xf32, #tpu.memory_space<vmem>>, vector<2x128xf32>
      tpu.vector_store %arg10[%c0_21, %c0_22], %28 {strides = array<i32>} : memref<2x128xf32, #tpu.memory_space<vmem>>, vector<2x128xf32>,
    } else {
    }
    return
  }
  func.func @transform_0(%arg0: i32, %arg1: i32, %arg2: i32) -> (i32, i32) {
    %c0_i32 = arith.constant 0 : i32
    return %arg0, %arg2 : i32, i32
  }
  func.func @transform_1(%arg0: i32, %arg1: i32, %arg2: i32) -> (i32, i32) {
    %c0_i32 = arith.constant 0 : i32
    %c0_i32_0 = arith.constant 0 : i32
    return %c0_i32, %arg2 : i32, i32
  }
  func.func @transform_2(%arg0: i32, %arg1: i32, %arg2: i32) -> (i32, i32) {
    %c0_i32 = arith.constant 0 : i32
    %c0_i32_0 = arith.constant 0 : i32
    return %c0_i32, %arg2 : i32, i32
  }
  func.func @transform_3(%arg0: i32, %arg1: i32, %arg2: i32) -> (i32, i32) {
    %c0_i32 = arith.constant 0 : i32
    return %arg2, %arg1 : i32, i32
  }
  func.func @transform_4(%arg0: i32, %arg1: i32, %arg2: i32) -> (i32, i32) {
    %c0_i32 = arith.constant 0 : i32
    %c0_i32_0 = arith.constant 0 : i32
    return %c0_i32, %arg1 : i32, i32
  }
  func.func @transform_5(%arg0: i32, %arg1: i32, %arg2: i32) -> (i32, i32) {
    %c0_i32 = arith.constant 0 : i32
    %c0_i32_0 = arith.constant 0 : i32
    return %c0_i32, %arg1 : i32, i32
  }
  func.func @transform_6(%arg0: i32, %arg1: i32, %arg2: i32) -> (i32, i32) {
    %c0_i32 = arith.constant 0 : i32
    %c0_i32_0 = arith.constant 0 : i32
    return %c0_i32, %arg1 : i32, i32
  }
  func.func @transform_7(%arg0: i32, %arg1: i32, %arg2: i32) -> (i32, i32) {
    %c0_i32 = arith.constant 0 : i32
    return %arg0, %arg1 : i32, i32
  }
}

</mosaic_0001>

<llo_original>
// kernel: tpu_custom_call.1
$region0: #{tpu_custom_call.1}
  #allocation0 [shape = 'u32[]', space=smem, size = 0x4, offset = 0x4, fixed_abs, tag = 'smem constant byte address 0x4 - core index']
  #allocation1 [shape = 'u32[144,128]{1,0:T(1,128)}', space=vmem, size = 0x12000, scoped, tag = 'internal scratch']
  #allocation2 [shape = 'f32[2,128]{1,0:T(2,128)}', space=vmem, size = 0x400, scoped, tag = 'scratch operand']
  %s0 = inlined_call_operand.hbm [shape: f32[2,1024], index: 0, kind: input, shape index: {}]
  %s1 = inlined_call_operand.hbm [shape: f32[1,1024], index: 1, kind: input, shape index: {}]
  %s2 = inlined_call_operand.hbm [shape: f32[1,1024], index: 2, kind: input, shape index: {}]
  %s3 = inlined_call_operand.hbm [shape: bf16[1024,128], index: 3, kind: input, shape index: {}]
  %s4 = inlined_call_operand.vmem [shape: f32[1,128], index: 4, kind: input, shape index: {}]
  %s5 = inlined_call_operand.vmem [shape: f32[1,128], index: 5, kind: input, shape index: {}]
  %s6 = inlined_call_operand.vmem [shape: f32[1,128], index: 6, kind: input, shape index: {}]
  %s7 = inlined_call_operand.hbm [shape: f32[2,128], index: 7, kind: output, shape index: {}]
  %s8 = sld [smem:[#allocation0]]
  $region85: #{tpu_custom_call.1} parent=0
    _
  %s10 = ssub.s32 1, %s8
  %s11 = scalar_select 0, %s10, %s8
  $region1: #{tpu_custom_call.1} parent=0
    #allocation3 [shape = 'u8[8192]{0}', space=vmem, size = 0x2000, scoped, tag = 'input window, operand 0']
    #allocation4 [shape = 's32[2]{0}', space=sflag, size = 0x8, scoped, tag = 'scoped memory for tpu_custom_call.1']
    #allocation5 [shape = 's32[2]{0}', space=sflag, size = 0x8, scoped, tag = 'scoped memory for tpu_custom_call.1']
    #allocation6 [shape = 'u8[4096]{0}', space=vmem, size = 0x1000, scoped, tag = 'input window, operand 1']
    #allocation7 [shape = 's32[2]{0}', space=sflag, size = 0x8, scoped, tag = 'scoped memory for tpu_custom_call.1']
    #allocation8 [shape = 'u8[4096]{0}', space=vmem, size = 0x1000, scoped, tag = 'input window, operand 2']
    #allocation9 [shape = 'u8[262144]{0}', space=vmem, size = 0x40000, scoped, tag = 'input window, operand 3']
    #allocation10 [shape = 's32[2]{0}', space=sflag, size = 0x8, scoped, tag = 'scoped memory for tpu_custom_call.1']
    #allocation11 [shape = 'u8[1024]{0}', space=vmem, size = 0x400, scoped, tag = 'output window, operand 0, single buffered']
    %12 = vsyncpa [#allocation4], 0
    %s13 = scalar_lea.sflag [#allocation4], 1
    %14 = vsyncpa %s13, 0
    %15 = vsyncpa [#allocation7], 0
    %s16 = scalar_lea.sflag [#allocation7], 1
    %17 = vsyncpa %s16, 0
    %18 = vsyncpa [#allocation10], 0
    %s19 = scalar_lea.sflag [#allocation10], 1
    %20 = vsyncpa %s19, 0
    %21 = vsyncpa [#allocation5], 0
    loop: start=0, step=1, limit=4
    $region2: #{tpu_custom_call.1} parent=1 // loop_pre_header
      _
    $region3: #{tpu_custom_call.1} parent=1 // loop_header
      %s23 = sphi 0, %s27
      %p24 = scmp.ge.s32.totalorder %s23, 4
      %s30 = sphi 0, %s49
      %s31 = sphi 0, %s45
      %s32 = sphi 0, %s41
      %s33 = sphi 0, %s30
      %s34 = sphi 0, %s31
      %s35 = sphi 0, %s32
      %s36 = sphi 0, %s33
      %s37 = sphi 0, %s34
      %s38 = sphi 0, %s35
      %s54 = sphi 0, %s56
      %s57 = sphi 0, %s54
      %s58 = sphi 0, %s57
      %s74 = sphi 0, %s58
      %s80 = sphi 0, %s82
      %s83 = sphi 0, %s80
      %s84 = sphi 0, %s83
      %s100 = sphi 0, %s84
      %s106 = sphi 0, %s108
      %s109 = sphi 0, %s106
      %s110 = sphi 0, %s109
      %s126 = sphi 0, %s110
      %s134 = sphi 0, %s136
      %s137 = sphi 0, %s134
      %s138 = sphi 0, %s137
      %s154 = sphi 0, %s138
      %s160 = sphi 0, %s162
      %s163 = sphi 0, %s160
      %s164 = sphi 0, %s163
      %s180 = sphi 0, %s164
      %s186 = sphi 0, %s188
      %s189 = sphi 0, %s186
      %s190 = sphi 0, %s189
      %s206 = sphi 0, %s190
      %s212 = sphi 0, %s214
      %s215 = sphi 0, %s212
      %s216 = sphi 0, %s215
      %s232 = sphi 0, %s216
      %s240 = sphi 0, %s242
      %s243 = sphi 0, %s240
      %s244 = sphi 0, %s243
      %s260 = sphi 0, %s244
    $region4: #{tpu_custom_call.1} parent=1 // loop_header_branch
      %26 = sbr.rel (%p24) target = $region8
    $region5: #{tpu_custom_call.1} parent=1 // loop_body
      %s28 = ssub.s32 %s23, 1
      %s29 = ssub.s32 %s23, 2
      %s39 = sadd.s32 1, %s32
      %p40 = scmp.ge.s32.totalorder %s39, 2
      %s41 = scalar_select %p40, 0, %s39
      %s42 = sadd.s32 1, %s31
      %s43 = scalar_select %p40, %s42, %s31
      %p44 = scmp.ge.s32.totalorder %s43, 1
      %s45 = scalar_select %p44, 0, %s43
      %s46 = sadd.s32 1, %s30
      %s47 = scalar_select %p44, %s46, %s30
      %p48 = scmp.ge.s32.totalorder %s47, 1
      %s49 = scalar_select %p48, 0, %s47
      %s50 = ssub.s32 %s30, %s49
      %s51 = ssub.s32 %s32, %s41
      %s52 = sor.u32 %s50, %s51
      %p53 = scmp.eq.s32.totalorder %s52, 0
      %s55 = sadd.s32 %s54, 1
      %s56 = scalar_select %p53, %s54, %s55
      %p59 = pneg %p53
      %p60 = scmp.eq.s32.totalorder %s23, 1
      %p61 = por %p59, %p60
      %p62 = scmp.ne.s32.totalorder %s54, %s57
      %p63 = scmp.eq.s32.totalorder %s23, 0
      %p64 = por %p62, %p63
      %p65 = scmp.ne.s32.totalorder %s54, %s57
      %p66 = scmp.eq.s32.totalorder %s28, 1
      %p67 = por %p65, %p66
      %p68 = scmp.ne.s32.totalorder %s57, %s58
      %p69 = scmp.eq.s32.totalorder %s28, 0
      %p70 = por %p68, %p69
      %p71 = scmp.ne.s32.totalorder %s57, %s58
      %p72 = scmp.eq.s32.totalorder %s29, 1
      %p73 = por %p71, %p72
      %p75 = scmp.ne.s32.totalorder %s58, %s74
      %p76 = scmp.eq.s32.totalorder %s29, 0
      %p77 = por %p75, %p76
      %s78 = ssub.s32 %s32, %s41
      %p79 = scmp.eq.s32.totalorder %s78, 0
      %s81 = sadd.s32 %s80, 1
      %s82 = scalar_select %p79, %s80, %s81
      %p85 = pneg %p79
      %p86 = scmp.eq.s32.totalorder %s23, 1
      %p87 = por %p85, %p86
      %p88 = scmp.ne.s32.totalorder %s80, %s83
      %p89 = scmp.eq.s32.totalorder %s23, 0
      %p90 = por %p88, %p89
      %p91 = scmp.ne.s32.totalorder %s80, %s83
      %p92 = scmp.eq.s32.totalorder %s28, 1
      %p93 = por %p91, %p92
      %p94 = scmp.ne.s32.totalorder %s83, %s84
      %p95 = scmp.eq.s32.totalorder %s28, 0
      %p96 = por %p94, %p95
      %p97 = scmp.ne.s32.totalorder %s83, %s84
      %p98 = scmp.eq.s32.totalorder %s29, 1
      %p99 = por %p97, %p98
      %p101 = scmp.ne.s32.totalorder %s84, %s100
      %p102 = scmp.eq.s32.totalorder %s29, 0
      %p103 = por %p101, %p102
      %s104 = ssub.s32 %s32, %s41
      %p105 = scmp.eq.s32.totalorder %s104, 0
      %s107 = sadd.s32 %s106, 1
      %s108 = scalar_select %p105, %s106, %s107
      %p111 = pneg %p105
      %p112 = scmp.eq.s32.totalorder %s23, 1
      %p113 = por %p111, %p112
      %p114 = scmp.ne.s32.totalorder %s106, %s109
      %p115 = scmp.eq.s32.totalorder %s23, 0
      %p116 = por %p114, %p115
      %p117 = scmp.ne.s32.totalorder %s106, %s109
      %p118 = scmp.eq.s32.totalorder %s28, 1
      %p119 = por %p117, %p118
      %p120 = scmp.ne.s32.totalorder %s109, %s110
      %p121 = scmp.eq.s32.totalorder %s28, 0
      %p122 = por %p120, %p121
      %p123 = scmp.ne.s32.totalorder %s109, %s110
      %p124 = scmp.eq.s32.totalorder %s29, 1
      %p125 = por %p123, %p124
      %p127 = scmp.ne.s32.totalorder %s110, %s126
      %p128 = scmp.eq.s32.totalorder %s29, 0
      %p129 = por %p127, %p128
      %s130 = ssub.s32 %s32, %s41
      %s131 = ssub.s32 %s31, %s45
      %s132 = sor.u32 %s130, %s131
      %p133 = scmp.eq.s32.totalorder %s132, 0
      %s135 = sadd.s32 %s134, 1
      %s136 = scalar_select %p133, %s134, %s135
      %p139 = pneg %p133
      %p140 = scmp.eq.s32.totalorder %s23, 1
      %p141 = por %p139, %p140
      %p142 = scmp.ne.s32.totalorder %s134, %s137
      %p143 = scmp.eq.s32.totalorder %s23, 0
      %p144 = por %p142, %p143
      %p145 = scmp.ne.s32.totalorder %s134, %s137
      %p146 = scmp.eq.s32.totalorder %s28, 1
      %p147 = por %p145, %p146
      %p148 = scmp.ne.s32.totalorder %s137, %s138
      %p149 = scmp.eq.s32.totalorder %s28, 0
      %p150 = por %p148, %p149
      %p151 = scmp.ne.s32.totalorder %s137, %s138
      %p152 = scmp.eq.s32.totalorder %s29, 1
      %p153 = por %p151, %p152
      %p155 = scmp.ne.s32.totalorder %s138, %s154
      %p156 = scmp.eq.s32.totalorder %s29, 0
      %p157 = por %p155, %p156
      %s158 = ssub.s32 %s31, %s45
      %p159 = scmp.eq.s32.totalorder %s158, 0
      %s161 = sadd.s32 %s160, 1
      %s162 = scalar_select %p159, %s160, %s161
      %p165 = pneg %p159
      %p166 = scmp.eq.s32.totalorder %s23, 1
      %p167 = por %p165, %p166
      %p168 = scmp.ne.s32.totalorder %s160, %s163
      %p169 = scmp.eq.s32.totalorder %s23, 0
      %p170 = por %p168, %p169
      %p171 = scmp.ne.s32.totalorder %s160, %s163
      %p172 = scmp.eq.s32.totalorder %s28, 1
      %p173 = por %p171, %p172
      %p174 = scmp.ne.s32.totalorder %s163, %s164
      %p175 = scmp.eq.s32.totalorder %s28, 0
      %p176 = por %p174, %p175
      %p177 = scmp.ne.s32.totalorder %s163, %s164
      %p178 = scmp.eq.s32.totalorder %s29, 1
      %p179 = por %p177, %p178
      %p181 = scmp.ne.s32.totalorder %s164, %s180
      %p182 = scmp.eq.s32.totalorder %s29, 0
      %p183 = por %p181, %p182
      %s184 = ssub.s32 %s31, %s45
      %p185 = scmp.eq.s32.totalorder %s184, 0
      %s187 = sadd.s32 %s186, 1
      %s188 = scalar_select %p185, %s186, %s187
      %p191 = pneg %p185
      %p192 = scmp.eq.s32.totalorder %s23, 1
      %p193 = por %p191, %p192
      %p194 = scmp.ne.s32.totalorder %s186, %s189
      %p195 = scmp.eq.s32.totalorder %s23, 0
      %p196 = por %p194, %p195
      %p197 = scmp.ne.s32.totalorder %s186, %s189
      %p198 = scmp.eq.s32.totalorder %s28, 1
      %p199 = por %p197, %p198
      %p200 = scmp.ne.s32.totalorder %s189, %s190
      %p201 = scmp.eq.s32.totalorder %s28, 0
      %p202 = por %p200, %p201
      %p203 = scmp.ne.s32.totalorder %s189, %s190
      %p204 = scmp.eq.s32.totalorder %s29, 1
      %p205 = por %p203, %p204
      %p207 = scmp.ne.s32.totalorder %s190, %s206
      %p208 = scmp.eq.s32.totalorder %s29, 0
      %p209 = por %p207, %p208
      %s210 = ssub.s32 %s31, %s45
      %p211 = scmp.eq.s32.totalorder %s210, 0
      %s213 = sadd.s32 %s212, 1
      %s214 = scalar_select %p211, %s212, %s213
      %p217 = pneg %p211
      %p218 = scmp.eq.s32.totalorder %s23, 1
      %p219 = por %p217, %p218
      %p220 = scmp.ne.s32.totalorder %s212, %s215
      %p221 = scmp.eq.s32.totalorder %s23, 0
      %p222 = por %p220, %p221
      %p223 = scmp.ne.s32.totalorder %s212, %s215
      %p224 = scmp.eq.s32.totalorder %s28, 1
      %p225 = por %p223, %p224
      %p226 = scmp.ne.s32.totalorder %s215, %s216
      %p227 = scmp.eq.s32.totalorder %s28, 0
      %p228 = por %p226, %p227
      %p229 = scmp.ne.s32.totalorder %s215, %s216
      %p230 = scmp.eq.s32.totalorder %s29, 1
      %p231 = por %p229, %p230
      %p233 = scmp.ne.s32.totalorder %s216, %s232
      %p234 = scmp.eq.s32.totalorder %s29, 0
      %p235 = por %p233, %p234
      %s236 = ssub.s32 %s30, %s49
      %s237 = ssub.s32 %s31, %s45
      %s238 = sor.u32 %s236, %s237
      %p239 = scmp.eq.s32.totalorder %s238, 0
      %s241 = sadd.s32 %s240, 1
      %s242 = scalar_select %p239, %s240, %s241
      %p245 = pneg %p239
      %p246 = scmp.eq.s32.totalorder %s23, 1
      %p247 = por %p245, %p246
      %p248 = scmp.ne.s32.totalorder %s240, %s243
      %p249 = scmp.eq.s32.totalorder %s23, 0
      %p250 = por %p248, %p249
      %p251 = scmp.ne.s32.totalorder %s240, %s243
      %p252 = scmp.eq.s32.totalorder %s28, 1
      %p253 = por %p251, %p252
      %p254 = scmp.ne.s32.totalorder %s243, %s244
      %p255 = scmp.eq.s32.totalorder %s28, 0
      %p256 = por %p254, %p255
      %p257 = scmp.ne.s32.totalorder %s243, %s244
      %p258 = scmp.eq.s32.totalorder %s29, 1
      %p259 = por %p257, %p258
      %p261 = scmp.ne.s32.totalorder %s244, %s260
      %p262 = scmp.eq.s32.totalorder %s29, 0
      %p263 = por %p261, %p262
      %p264 = scmp.le.s32.totalorder 1, %s23
      %p265 = scmp.lt.s32.totalorder %s23, 3
      %p266 = pnand %p264, %p265
      %p267 = pneg %p266
      // Predicated region
      $region9: #{tpu_custom_call.1} parent=5 // pred_check
        _
      $region10: #{tpu_custom_call.1} parent=5 // pred_check_branch
        %269 = sbr.rel (%p266) target = $region12
      $region11: #{tpu_custom_call.1} parent=5 // pred_region
        %s270 = ssub.s32 %s23, 1
        // Predicated region
        $region13: #{tpu_custom_call.1} parent=11 // pred_check
          %p271 = pneg %p176
        $region14: #{tpu_custom_call.1} parent=11 // pred_check_branch
          %273 = sbr.rel (%p271) target = $region16
        $region15: #{tpu_custom_call.1} parent=11 // pred_region
          %p274 = scmp.lt.s32.totalorder %s34, 0
          %s275 = scalar_select %p274, %s34, 0
          %s276 = scalar_lea.vmem %s4, %s275
        $region16: #{tpu_custom_call.1} parent=11 // pred_fallthru
          _
        // Predicated region
        $region17: #{tpu_custom_call.1} parent=11 // pred_check
          %p277 = pneg %p202
        $region18: #{tpu_custom_call.1} parent=11 // pred_check_branch
          %279 = sbr.rel (%p277) target = $region20
        $region19: #{tpu_custom_call.1} parent=11 // pred_region
          %p280 = scmp.lt.s32.totalorder %s34, 0
          %s281 = scalar_select %p280, %s34, 0
          %s282 = scalar_lea.vmem %s5, %s281
        $region20: #{tpu_custom_call.1} parent=11 // pred_fallthru
          _
        // Predicated region
        $region21: #{tpu_custom_call.1} parent=11 // pred_check
          %p283 = pneg %p228
        $region22: #{tpu_custom_call.1} parent=11 // pred_check_branch
          %285 = sbr.rel (%p283) target = $region24
        $region23: #{tpu_custom_call.1} parent=11 // pred_region
          %p286 = scmp.lt.s32.totalorder %s34, 0
          %s287 = scalar_select %p286, %s34, 0
          %s288 = scalar_lea.vmem %s6, %s287
        $region24: #{tpu_custom_call.1} parent=11 // pred_fallthru
          _
      $region12: #{tpu_custom_call.1} parent=5 // pred_fallthru
        _
      %p289 = scmp.lt.s32.totalorder %s23, 2
      // Predicated region
      $region25: #{tpu_custom_call.1} parent=5 // pred_check
        %p290 = pneg %p289
      $region26: #{tpu_custom_call.1} parent=5 // pred_check_branch
        %292 = sbr.rel (%p290) target = $region28
      $region27: #{tpu_custom_call.1} parent=5 // pred_region
        // Predicated region
        $region29: #{tpu_custom_call.1} parent=27 // pred_check
          %p293 = pneg %p64
        $region30: #{tpu_custom_call.1} parent=27 // pred_check_branch
          %295 = sbr.rel (%p293) target = $region32
        $region31: #{tpu_custom_call.1} parent=27 // pred_region
          %s296 = sand.u32 %s54, 1
          %s297 = scalar_lea.sflag [#allocation4], %s296
          %s298 = sand.u32 %s54, 1
          %s299 = smul.addr %s298, 8
          %s300 = scalar_lea.vmem [#allocation3], %s299
          %s301 = smul.u32 4, %s32
          %s303 = ssub.s32 128, 128
          %304 = vsyncadd %s297, %s303
          %s305 = smul.addr %s30, 8
          %s306 = sadd.s32 %s301, %s305
          %s307 = smul.addr %s306, 32
          %s308 = scalar_lea.hbm %s0, %s307
          %s310 = sshll.u32 %s300, 4
          %s311 = int_to_ptr.vmem [resolvable:$true] %s310
          %313 = dma.hbm_to_vmem [thread:$0]  %s308, 128, %s311, %s297
        $region32: #{tpu_custom_call.1} parent=27 // pred_fallthru
          _
        // Predicated region
        $region33: #{tpu_custom_call.1} parent=27 // pred_check
          %p314 = pneg %p90
        $region34: #{tpu_custom_call.1} parent=27 // pred_check_branch
          %316 = sbr.rel (%p314) target = $region36
        $region35: #{tpu_custom_call.1} parent=27 // pred_region
          %s317 = sand.u32 %s23, 1
          %s318 = scalar_lea.sflag [#allocation7], %s317
          %s319 = sand.u32 %s80, 1
          %s320 = smul.addr %s319, 4
          %s321 = scalar_lea.vmem [#allocation6], %s320
          %s322 = smul.u32 4, %s32
          %s324 = ssub.s32 64, 64
          %325 = vsyncadd %s318, %s324
          %s326 = smul.addr %s322, 16
          %s327 = scalar_lea.hbm %s1, %s326
          %s329 = sshll.u32 %s321, 4
          %s330 = int_to_ptr.vmem [resolvable:$true] %s329
          %332 = dma.hbm_to_vmem [thread:$0]  %s327, 64, %s330, %s318
        $region36: #{tpu_custom_call.1} parent=27 // pred_fallthru
          _
        // Predicated region
        $region37: #{tpu_custom_call.1} parent=27 // pred_check
          %p333 = pneg %p116
        $region38: #{tpu_custom_call.1} parent=27 // pred_check_branch
          %335 = sbr.rel (%p333) target = $region40
        $region39: #{tpu_custom_call.1} parent=27 // pred_region
          %s336 = sand.u32 %s23, 1
          %s337 = scalar_lea.sflag [#allocation7], %s336
          %s338 = sand.u32 %s106, 1
          %s339 = smul.addr %s338, 4
          %s340 = scalar_lea.vmem [#allocation8], %s339
          %s341 = smul.u32 4, %s32
          %s343 = ssub.s32 64, 64
          %344 = vsyncadd %s337, %s343
          %s345 = smul.addr %s341, 16
          %s346 = scalar_lea.hbm %s2, %s345
          %s348 = sshll.u32 %s340, 4
          %s349 = int_to_ptr.vmem [resolvable:$true] %s348
          %351 = dma.hbm_to_vmem [thread:$0]  %s346, 64, %s349, %s337
        $region40: #{tpu_custom_call.1} parent=27 // pred_fallthru
          _
        // Predicated region
        $region41: #{tpu_custom_call.1} parent=27 // pred_check
          %p352 = pneg %p144
        $region42: #{tpu_custom_call.1} parent=27 // pred_check_branch
          %354 = sbr.rel (%p352) target = $region44
        $region43: #{tpu_custom_call.1} parent=27 // pred_region
          %s355 = sand.u32 %s134, 1
          %s356 = scalar_lea.sflag [#allocation10], %s355
          %s357 = sand.u32 %s134, 1
          %s358 = smul.addr %s357, 256
          %s359 = scalar_lea.vmem [#allocation9], %s358
          %s360 = smul.u32 64, %s32
          %s362 = ssub.s32 4096, 4096
          %363 = vsyncadd %s356, %s362
          %s364 = sadd.s32 %s31, %s360
          %s365 = smul.addr %s364, 64
          %s366 = scalar_lea.hbm %s3, %s365
          %s367 = sshll.u32 %s359, 4
          %s368 = int_to_ptr.vmem [resolvable:$true] %s367
          %373 = dma.hbm_to_vmem [thread:$0]  %s366, 4096, %s368, %s356, 64, 64, 4
        $region44: #{tpu_custom_call.1} parent=27 // pred_fallthru
          _
      $region28: #{tpu_custom_call.1} parent=5 // pred_fallthru
        _
      %p374 = scmp.le.s32.totalorder 1, %s23
      %p375 = scmp.lt.s32.totalorder %s23, 3
      %p376 = pnand %p374, %p375
      %p377 = pneg %p376
      // Predicated region
      $region45: #{tpu_custom_call.1} parent=5 // pred_check
        _
      $region46: #{tpu_custom_call.1} parent=5 // pred_check_branch
        %379 = sbr.rel (%p376) target = $region48
      $region47: #{tpu_custom_call.1} parent=5 // pred_region
        %s380 = ssub.s32 %s23, 1
        %s381 = sand.u32 %s57, 1
        %s382 = scalar_lea.sflag [#allocation4], %s381
        %s383 = sand.u32 %s57, 1
        %s384 = smul.addr %s383, 8
        %s385 = scalar_lea.vmem [#allocation3], %s384
        // Predicated region
        $region49: #{tpu_custom_call.1} parent=47 // pred_check
          %p386 = pneg %p70
        $region50: #{tpu_custom_call.1} parent=47 // pred_check_branch
          %388 = sbr.rel (%p386) target = $region52
        $region51: #{tpu_custom_call.1} parent=47 // pred_region
          %389 = dma.done %s382, 128
        $region52: #{tpu_custom_call.1} parent=47 // pred_fallthru
          _
        %s390 = sand.u32 %s28, 1
        %s391 = scalar_lea.sflag [#allocation7], %s390
        %s392 = sand.u32 %s83, 1
        %s393 = smul.addr %s392, 4
        %s394 = scalar_lea.vmem [#allocation6], %s393
        // Predicated region
        $region53: #{tpu_custom_call.1} parent=47 // pred_check
          %p395 = pneg %p96
        $region54: #{tpu_custom_call.1} parent=47 // pred_check_branch
          %397 = sbr.rel (%p395) target = $region56
        $region55: #{tpu_custom_call.1} parent=47 // pred_region
          %398 = dma.done %s391, 64
        $region56: #{tpu_custom_call.1} parent=47 // pred_fallthru
          _
        %s399 = sand.u32 %s28, 1
        %s400 = scalar_lea.sflag [#allocation7], %s399
        %s401 = sand.u32 %s109, 1
        %s402 = smul.addr %s401, 4
        %s403 = scalar_lea.vmem [#allocation8], %s402
        // Predicated region
        $region57: #{tpu_custom_call.1} parent=47 // pred_check
          %p404 = pneg %p122
        $region58: #{tpu_custom_call.1} parent=47 // pred_check_branch
          %406 = sbr.rel (%p404) target = $region60
        $region59: #{tpu_custom_call.1} parent=47 // pred_region
          %407 = dma.done %s400, 64
        $region60: #{tpu_custom_call.1} parent=47 // pred_fallthru
          _
        %s408 = sand.u32 %s137, 1
        %s409 = scalar_lea.sflag [#allocation10], %s408
        %s410 = sand.u32 %s137, 1
        %s411 = smul.addr %s410, 256
        %s412 = scalar_lea.vmem [#allocation9], %s411
        // Predicated region
        $region61: #{tpu_custom_call.1} parent=47 // pred_check
          %p413 = pneg %p150
        $region62: #{tpu_custom_call.1} parent=47 // pred_check_branch
          %415 = sbr.rel (%p413) target = $region64
        $region63: #{tpu_custom_call.1} parent=47 // pred_region
          %416 = dma.done %s409, 4096
        $region64: #{tpu_custom_call.1} parent=47 // pred_fallthru
          _
        %s417 = sand.u32 %s57, 1
        %s418 = scalar_lea.sflag [#allocation4], %s417
        %s419 = sand.u32 %s57, 1
        %s420 = smul.addr %s419, 8
        %s421 = scalar_lea.vmem [#allocation3], %s420
        %p422 = pneg %p70
        %p423 = pneg %p67
        %s424 = sand.u32 %s28, 1
        %s425 = scalar_lea.sflag [#allocation7], %s424
        %s426 = sand.u32 %s83, 1
        %s427 = smul.addr %s426, 4
        %s428 = scalar_lea.vmem [#allocation6], %s427
        %p429 = pneg %p96
        %p430 = pneg %p93
        %s431 = sand.u32 %s28, 1
        %s432 = scalar_lea.sflag [#allocation7], %s431
        %s433 = sand.u32 %s109, 1
        %s434 = smul.addr %s433, 4
        %s435 = scalar_lea.vmem [#allocation8], %s434
        %p436 = pneg %p122
        %p437 = pneg %p119
        %s438 = sand.u32 %s137, 1
        %s439 = scalar_lea.sflag [#allocation10], %s438
        %s440 = sand.u32 %s137, 1
        %s441 = smul.addr %s440, 256
        %s442 = scalar_lea.vmem [#allocation9], %s441
        %p443 = pneg %p150
        %p444 = pneg %p147
        %p445 = scmp.lt.s32.totalorder %s34, 0
        %s446 = scalar_select %p445, %s34, 0
        %s447 = scalar_lea.vmem %s4, %s446
        %p448 = pneg %p176
        %p449 = pneg %p173
        %p450 = scmp.lt.s32.totalorder %s34, 0
        %s451 = scalar_select %p450, %s34, 0
        %s452 = scalar_lea.vmem %s5, %s451
        %p453 = pneg %p202
        %p454 = pneg %p199
        %p455 = scmp.lt.s32.totalorder %s34, 0
        %s456 = scalar_select %p455, %s34, 0
        %s457 = scalar_lea.vmem %s6, %s456
        %p458 = pneg %p228
        %p459 = pneg %p225
        %p460 = pneg %p256
        %p461 = pneg %p253
        %s462 = smul.u32 4, %s35
        %s463 = smul.u32 4, %s35
        %s464 = smul.u32 4, %s35
        %s465 = smul.u32 64, %s35
        %p466 = scmp.lt.s32.totalorder %s34, 0
        %s467 = scalar_select %p466, %s34, 0
        %s468 = scalar_lea.vmem %s4, %s467
        %p469 = scmp.lt.s32.totalorder %s34, 0
        %s470 = scalar_select %p469, %s34, 0
        %s471 = scalar_lea.vmem %s5, %s470
        %p472 = scmp.lt.s32.totalorder %s34, 0
        %s473 = scalar_select %p472, %s34, 0
        %s474 = scalar_lea.vmem %s6, %s473
        %p476 = scmp.eq.s32.totalorder %s35, 0
        // Predicated region
        $region65: #{tpu_custom_call.1} parent=47 // pred_check
          %p477 = pneg %p476
        $region66: #{tpu_custom_call.1} parent=47 // pred_check_branch
          %479 = sbr.rel (%p477) target = $region68
        $region67: #{tpu_custom_call.1} parent=47 // pred_region
          %480 = vst [vmem:[#allocation2] sm:$0x3] 0.0
        $region68: #{tpu_custom_call.1} parent=47 // pred_fallthru
          _
        %v481 = vld [vmem:[%s385] sm:$0xff]
        %v482 = vld [vmem:[%s394] sm:$0xf]
        %v484 = vlaneseq
        %v485 = vshrl.u32 %v484, 7
        %v486 = vsub.s32 0, %v485
        %v487 = vrot.slane %v482, %v486
        %v488 = vlaneseq
        %v489 = vshrl.u32 %v488, 7
        %v490 = vsub.s32 1, %v489
        %v491 = vrot.slane %v482, %v490
        %v492 = vlaneseq
        %v493 = vshrl.u32 %v492, 7
        %v494 = vsub.s32 2, %v493
        %v495 = vrot.slane %v482, %v494
        %v496 = vlaneseq
        %v497 = vshrl.u32 %v496, 7
        %v498 = vsub.s32 3, %v497
        %v499 = vrot.slane %v482, %v498
        %v500 = vcombine.low %v487, %v491
        %v501 = vcombine.low %v495, %v499
        %v503 = vunpack.c.l.s4 1983009808
        %v504 = vunpack.c.0.s8 %v503
        %v505 = vlaneseq
        %v506 = vshrl.u32 %v505, 7
        %v507 = vsub.s32 %v504, %v506
        %v508 = vrot.slane %v500, %v507
        %v510 = vunpack.c.l.s4 1983009808
        %v511 = vunpack.c.0.s8 %v510
        %v512 = vlaneseq
        %v513 = vshrl.u32 %v512, 7
        %v514 = vsub.s32 %v511, %v513
        %v515 = vrot.slane %v501, %v514
        %v516 = vcombine.low %v508, %v515
        %v518 = vmul.f32 %v481, %v516
        %v519 = vld [vmem:[%s403] sm:$0xf]
        %v521 = vlaneseq
        %v522 = vshrl.u32 %v521, 7
        %v523 = vsub.s32 0, %v522
        %v524 = vrot.slane %v519, %v523
        %v525 = vlaneseq
        %v526 = vshrl.u32 %v525, 7
        %v527 = vsub.s32 1, %v526
        %v528 = vrot.slane %v519, %v527
        %v529 = vlaneseq
        %v530 = vshrl.u32 %v529, 7
        %v531 = vsub.s32 2, %v530
        %v532 = vrot.slane %v519, %v531
        %v533 = vlaneseq
        %v534 = vshrl.u32 %v533, 7
        %v535 = vsub.s32 3, %v534
        %v536 = vrot.slane %v519, %v535
        %v537 = vcombine.low %v524, %v528
        %v538 = vcombine.low %v532, %v536
        %v540 = vunpack.c.l.s4 1983009808
        %v541 = vunpack.c.0.s8 %v540
        %v542 = vlaneseq
        %v543 = vshrl.u32 %v542, 7
        %v544 = vsub.s32 %v541, %v543
        %v545 = vrot.slane %v537, %v544
        %v547 = vunpack.c.l.s4 1983009808
        %v548 = vunpack.c.0.s8 %v547
        %v549 = vlaneseq
        %v550 = vshrl.u32 %v549, 7
        %v551 = vsub.s32 %v548, %v550
        %v552 = vrot.slane %v538, %v551
        %v553 = vcombine.low %v545, %v552
        %v555 = vadd.f32 %v518, %v553
        %v556 = vld [vmem:[#allocation2] sm:$0x3]
        %v558 = vcombine.high %v555, %v555
        %v560 = vunpack.c.l.s4 1983009808
        %v561 = vunpack.c.0.s8 %v560
        %v562 = vlaneseq
        %v563 = vshrl.u32 %v562, 7
        %v564 = vsub.s32 %v561, %v563
        %v565 = vrot.slane %v555, %v564
        %v567 = vunpack.c.l.s4 1983009808
        %v568 = vunpack.c.0.s8 %v567
        %v569 = vlaneseq
        %v570 = vshrl.u32 %v569, 7
        %v571 = vsub.s32 %v568, %v570
        %v572 = vrot.slane %v558, %v571
        %v573 = vcombine.high %v565, %v565
        %v574 = vcombine.high %v572, %v572
        %v579 = vpack.c.bf16 %v565, %v565
        %v580 = vpack.c.bf16 %v573, %v573
        %v581 = vpack.c.bf16 %v572, %v572
        %v582 = vpack.c.bf16 %v574, %v574
        %v583 = vld [vmem:[%s412] sm:$0xf]
        %v584 = vld [vmem:[%s412 + $0x4] sm:$0xf]
        %v585 = vld [vmem:[%s412 + $0x8] sm:$0xf]
        %v586 = vld [vmem:[%s412 + $0xc] sm:$0xf]
        %v587 = vld [vmem:[%s412 + $0x10] sm:$0xf]
        %v588 = vld [vmem:[%s412 + $0x14] sm:$0xf]
        %v589 = vld [vmem:[%s412 + $0x18] sm:$0xf]
        %v590 = vld [vmem:[%s412 + $0x1c] sm:$0xf]
        %v591 = vld [vmem:[%s412 + $0x20] sm:$0xf]
        %v592 = vld [vmem:[%s412 + $0x24] sm:$0xf]
        %v593 = vld [vmem:[%s412 + $0x28] sm:$0xf]
        %v594 = vld [vmem:[%s412 + $0x2c] sm:$0xf]
        %v595 = vld [vmem:[%s412 + $0x30] sm:$0xf]
        %v596 = vld [vmem:[%s412 + $0x34] sm:$0xf]
        %v597 = vld [vmem:[%s412 + $0x38] sm:$0xf]
        %v598 = vld [vmem:[%s412 + $0x3c] sm:$0xf]
        %v599 = vld [vmem:[%s412 + $0x40] sm:$0xf]
        %v600 = vld [vmem:[%s412 + $0x44] sm:$0xf]
        %v601 = vld [vmem:[%s412 + $0x48] sm:$0xf]
        %v602 = vld [vmem:[%s412 + $0x4c] sm:$0xf]
        %v603 = vld [vmem:[%s412 + $0x50] sm:$0xf]
        %v604 = vld [vmem:[%s412 + $0x54] sm:$0xf]
        %v605 = vld [vmem:[%s412 + $0x58] sm:$0xf]
        %v606 = vld [vmem:[%s412 + $0x5c] sm:$0xf]
        %v607 = vld [vmem:[%s412 + $0x60] sm:$0xf]
        %v608 = vld [vmem:[%s412 + $0x64] sm:$0xf]
        %v609 = vld [vmem:[%s412 + $0x68] sm:$0xf]
        %v610 = vld [vmem:[%s412 + $0x6c] sm:$0xf]
        %v611 = vld [vmem:[%s412 + $0x70] sm:$0xf]
        %v612 = vld [vmem:[%s412 + $0x74] sm:$0xf]
        %v613 = vld [vmem:[%s412 + $0x78] sm:$0xf]
        %v614 = vld [vmem:[%s412 + $0x7c] sm:$0xf]
        %v615 = vld [vmem:[%s412 + $0x80] sm:$0xf]
        %v616 = vld [vmem:[%s412 + $0x84] sm:$0xf]
        %v617 = vld [vmem:[%s412 + $0x88] sm:$0xf]
        %v618 = vld [vmem:[%s412 + $0x8c] sm:$0xf]
        %v619 = vld [vmem:[%s412 + $0x90] sm:$0xf]
        %v620 = vld [vmem:[%s412 + $0x94] sm:$0xf]
        %v621 = vld [vmem:[%s412 + $0x98] sm:$0xf]
        %v622 = vld [vmem:[%s412 + $0x9c] sm:$0xf]
        %v623 = vld [vmem:[%s412 + $0xa0] sm:$0xf]
        %v624 = vld [vmem:[%s412 + $0xa4] sm:$0xf]
        %v625 = vld [vmem:[%s412 + $0xa8] sm:$0xf]
        %v626 = vld [vmem:[%s412 + $0xac] sm:$0xf]
        %v627 = vld [vmem:[%s412 + $0xb0] sm:$0xf]
        %v628 = vld [vmem:[%s412 + $0xb4] sm:$0xf]
        %v629 = vld [vmem:[%s412 + $0xb8] sm:$0xf]
        %v630 = vld [vmem:[%s412 + $0xbc] sm:$0xf]
        %v631 = vld [vmem:[%s412 + $0xc0] sm:$0xf]
        %v632 = vld [vmem:[%s412 + $0xc4] sm:$0xf]
        %v633 = vld [vmem:[%s412 + $0xc8] sm:$0xf]
        %v634 = vld [vmem:[%s412 + $0xcc] sm:$0xf]
        %v635 = vld [vmem:[%s412 + $0xd0] sm:$0xf]
        %v636 = vld [vmem:[%s412 + $0xd4] sm:$0xf]
        %v637 = vld [vmem:[%s412 + $0xd8] sm:$0xf]
        %v638 = vld [vmem:[%s412 + $0xdc] sm:$0xf]
        %v639 = vld [vmem:[%s412 + $0xe0] sm:$0xf]
        %v640 = vld [vmem:[%s412 + $0xe4] sm:$0xf]
        %v641 = vld [vmem:[%s412 + $0xe8] sm:$0xf]
        %v642 = vld [vmem:[%s412 + $0xec] sm:$0xf]
        %v643 = vld [vmem:[%s412 + $0xf0] sm:$0xf]
        %v644 = vld [vmem:[%s412 + $0xf4] sm:$0xf]
        %v645 = vld [vmem:[%s412 + $0xf8] sm:$0xf]
        %v646 = vld [vmem:[%s412 + $0xfc] sm:$0xf]
        %v711 = vunpack.c.l.b16 %v583
        %v712 = vunpack.c.l.b16 %v584
        %v713 = vunpack.c.l.b16 %v585
        %v714 = vunpack.c.l.b16 %v586
        %v715 = vunpack.c.l.b16 %v587
        %v716 = vunpack.c.l.b16 %v588
        %v717 = vunpack.c.l.b16 %v589
        %v718 = vunpack.c.l.b16 %v590
        %v719 = vunpack.c.l.b16 %v591
        %v720 = vunpack.c.l.b16 %v592
        %v721 = vunpack.c.l.b16 %v593
        %v722 = vunpack.c.l.b16 %v594
        %v723 = vunpack.c.l.b16 %v595
        %v724 = vunpack.c.l.b16 %v596
        %v725 = vunpack.c.l.b16 %v597
        %v726 = vunpack.c.l.b16 %v598
        %v727 = vunpack.c.l.b16 %v599
        %v728 = vunpack.c.l.b16 %v600
        %v729 = vunpack.c.l.b16 %v601
        %v730 = vunpack.c.l.b16 %v602
        %v731 = vunpack.c.l.b16 %v603
        %v732 = vunpack.c.l.b16 %v604
        %v733 = vunpack.c.l.b16 %v605
        %v734 = vunpack.c.l.b16 %v606
        %v735 = vunpack.c.l.b16 %v607
        %v736 = vunpack.c.l.b16 %v608
        %v737 = vunpack.c.l.b16 %v609
        %v738 = vunpack.c.l.b16 %v610
        %v739 = vunpack.c.l.b16 %v611
        %v740 = vunpack.c.l.b16 %v612
        %v741 = vunpack.c.l.b16 %v613
        %v742 = vunpack.c.l.b16 %v614
        %v743 = vunpack.c.l.b16 %v615
        %v744 = vunpack.c.l.b16 %v616
        %v745 = vunpack.c.l.b16 %v617
        %v746 = vunpack.c.l.b16 %v618
        %v747 = vunpack.c.l.b16 %v619
        %v748 = vunpack.c.l.b16 %v620
        %v749 = vunpack.c.l.b16 %v621
        %v750 = vunpack.c.l.b16 %v622
        %v751 = vunpack.c.l.b16 %v623
        %v752 = vunpack.c.l.b16 %v624
        %v753 = vunpack.c.l.b16 %v625
        %v754 = vunpack.c.l.b16 %v626
        %v755 = vunpack.c.l.b16 %v627
        %v756 = vunpack.c.l.b16 %v628
        %v757 = vunpack.c.l.b16 %v629
        %v758 = vunpack.c.l.b16 %v630
        %v759 = vunpack.c.l.b16 %v631
        %v760 = vunpack.c.l.b16 %v632
        %v761 = vunpack.c.l.b16 %v633
        %v762 = vunpack.c.l.b16 %v634
        %v763 = vunpack.c.l.b16 %v635
        %v764 = vunpack.c.l.b16 %v636
        %v765 = vunpack.c.l.b16 %v637
        %v766 = vunpack.c.l.b16 %v638
        %v767 = vunpack.c.l.b16 %v639
        %v768 = vunpack.c.l.b16 %v640
        %v769 = vunpack.c.l.b16 %v641
        %v770 = vunpack.c.l.b16 %v642
        %v771 = vunpack.c.l.b16 %v643
        %v772 = vunpack.c.l.b16 %v644
        %v773 = vunpack.c.l.b16 %v645
        %v774 = vunpack.c.l.b16 %v646
        %v775 = vpack.c.b16 %v712, %v711
        %v776 = vpack.c.b16 %v714, %v713
        %v777 = vpack.c.b16 %v716, %v715
        %v778 = vpack.c.b16 %v718, %v717
        %v779 = vpack.c.b16 %v720, %v719
        %v780 = vpack.c.b16 %v722, %v721
        %v781 = vpack.c.b16 %v724, %v723
        %v782 = vpack.c.b16 %v726, %v725
        %v783 = vpack.c.b16 %v728, %v727
        %v784 = vpack.c.b16 %v730, %v729
        %v785 = vpack.c.b16 %v732, %v731
        %v786 = vpack.c.b16 %v734, %v733
        %v787 = vpack.c.b16 %v736, %v735
        %v788 = vpack.c.b16 %v738, %v737
        %v789 = vpack.c.b16 %v740, %v739
        %v790 = vpack.c.b16 %v742, %v741
        %v791 = vpack.c.b16 %v744, %v743
        %v792 = vpack.c.b16 %v746, %v745
        %v793 = vpack.c.b16 %v748, %v747
        %v794 = vpack.c.b16 %v750, %v749
        %v795 = vpack.c.b16 %v752, %v751
        %v796 = vpack.c.b16 %v754, %v753
        %v797 = vpack.c.b16 %v756, %v755
        %v798 = vpack.c.b16 %v758, %v757
        %v799 = vpack.c.b16 %v760, %v759
        %v800 = vpack.c.b16 %v762, %v761
        %v801 = vpack.c.b16 %v764, %v763
        %v802 = vpack.c.b16 %v766, %v765
        %v803 = vpack.c.b16 %v768, %v767
        %v804 = vpack.c.b16 %v770, %v769
        %v805 = vpack.c.b16 %v772, %v771
        %v806 = vpack.c.b16 %v774, %v773
        %839 = vmatprep.subr.bf16.mxu0 0
        %840 = vmatpush1.bf16.msra.mxu0 %v782
        %841 = vmatprep.subr.bf16.mxu0 0
        %842 = vmatpush1.bf16.msra.mxu0 %v781
        %843 = vmatprep.subr.bf16.mxu0 0
        %844 = vmatpush1.bf16.msra.mxu0 %v780
        %845 = vmatprep.subr.bf16.mxu0 0
        %846 = vmatpush1.bf16.msra.mxu0 %v779
        %847 = vmatprep.subr.bf16.mxu0 0
        %848 = vmatpush1.bf16.msra.mxu0 %v778
        %849 = vmatprep.subr.bf16.mxu0 0
        %850 = vmatpush1.bf16.msra.mxu0 %v777
        %851 = vmatprep.subr.bf16.mxu0 0
        %852 = vmatpush1.bf16.msra.mxu0 %v776
        %853 = vmatprep.subr.bf16.mxu0 0
        %854 = vmatpush1.bf16.msra.mxu0 %v775
        %855 = vmatprep.subr.bf16.mxu0 0
        %856 = vmatpush2.bf16.msra.mxu0 %v790
        %857 = vmatprep.subr.bf16.mxu0 0
        %858 = vmatpush2.bf16.msra.mxu0 %v789
        %859 = vmatprep.subr.bf16.mxu0 0
        %860 = vmatpush2.bf16.msra.mxu0 %v788
        %861 = vmatprep.subr.bf16.mxu0 0
        %862 = vmatpush2.bf16.msra.mxu0 %v787
        %863 = vmatprep.subr.bf16.mxu0 0
        %864 = vmatpush2.bf16.msra.mxu0 %v786
        %865 = vmatprep.subr.bf16.mxu0 0
        %866 = vmatpush2.bf16.msra.mxu0 %v785
        %867 = vmatprep.subr.bf16.mxu0 0
        %868 = vmatpush2.bf16.msra.mxu0 %v784
        %869 = vmatprep.subr.bf16.mxu0 0
        %870 = vmatpush2.bf16.msra.mxu0 %v783
        %871 = vmatprep.mubr.bf16.mxu0 %v580
        %872 = vmatmul.mubr.bf16.gmra.mxu0 %v579
        %v873 = vpop.f32.mrf.mxu0
        %v874 = vadd.f32 0.0, %v873
        %v875 = vpop.f32.mrf.mxu0
        %v876 = vpop.f32.mrf.mxu0
        %v877 = vpop.f32.mrf.mxu0
        %878 = vdwg.mxu0
        %879 = vmatprep.subr.bf16.mxu0 0
        %880 = vmatpush1.bf16.msra.mxu0 %v798
        %881 = vmatprep.subr.bf16.mxu0 0
        %882 = vmatpush1.bf16.msra.mxu0 %v797
        %883 = vmatprep.subr.bf16.mxu0 0
        %884 = vmatpush1.bf16.msra.mxu0 %v796
        %885 = vmatprep.subr.bf16.mxu0 0
        %886 = vmatpush1.bf16.msra.mxu0 %v795
        %887 = vmatprep.subr.bf16.mxu0 0
        %888 = vmatpush1.bf16.msra.mxu0 %v794
        %889 = vmatprep.subr.bf16.mxu0 0
        %890 = vmatpush1.bf16.msra.mxu0 %v793
        %891 = vmatprep.subr.bf16.mxu0 0
        %892 = vmatpush1.bf16.msra.mxu0 %v792
        %893 = vmatprep.subr.bf16.mxu0 0
        %894 = vmatpush1.bf16.msra.mxu0 %v791
        %895 = vmatprep.subr.bf16.mxu0 0
        %896 = vmatpush2.bf16.msra.mxu0 %v806
        %897 = vmatprep.subr.bf16.mxu0 0
        %898 = vmatpush2.bf16.msra.mxu0 %v805
        %899 = vmatprep.subr.bf16.mxu0 0
        %900 = vmatpush2.bf16.msra.mxu0 %v804
        %901 = vmatprep.subr.bf16.mxu0 0
        %902 = vmatpush2.bf16.msra.mxu0 %v803
        %903 = vmatprep.subr.bf16.mxu0 0
        %904 = vmatpush2.bf16.msra.mxu0 %v802
        %905 = vmatprep.subr.bf16.mxu0 0
        %906 = vmatpush2.bf16.msra.mxu0 %v801
        %907 = vmatprep.subr.bf16.mxu0 0
        %908 = vmatpush2.bf16.msra.mxu0 %v800
        %909 = vmatprep.subr.bf16.mxu0 0
        %910 = vmatpush2.bf16.msra.mxu0 %v799
        %911 = vmatprep.mubr.bf16.mxu0 %v582
        %912 = vmatmul.mubr.bf16.gmra.mxu0 %v581
        %v913 = vpop.f32.mrf.mxu0
        %v914 = vadd.f32 %v874, %v913
        %v915 = vpop.f32.mrf.mxu0
        %v916 = vpop.f32.mrf.mxu0
        %v917 = vpop.f32.mrf.mxu0
        %918 = vdwg.mxu0
        %v919 = vadd.f32 %v556, %v914
        %920 = vst [vmem:[#allocation2] sm:$0x3] %v919
        %p921 = scmp.eq.s32.totalorder %s35, 1
        // Predicated region
        $region69: #{tpu_custom_call.1} parent=47 // pred_check
          %p922 = pneg %p921
        $region70: #{tpu_custom_call.1} parent=47 // pred_check_branch
          %924 = sbr.rel (%p922) target = $region72
        $region71: #{tpu_custom_call.1} parent=47 // pred_region
          %v925 = vld [vmem:[#allocation2] sm:$0x3]
          %v926 = vld [vmem:[%s468] sm:$0x1]
          %v928 = vlaneseq
          %v929 = vshrl.u32 %v928, 7
          %v930 = vsub.s32 0, %v929
          %v931 = vrot.slane %v926, %v930
          %v933 = vadd.f32 %v925, %v931
          %v934 = vld [vmem:[%s471] sm:$0x1]
          %v936 = vlaneseq
          %v937 = vshrl.u32 %v936, 7
          %v938 = vsub.s32 0, %v937
          %v939 = vrot.slane %v934, %v938
          %v941 = vmul.f32 %v933, %v939
          %v942 = vld [vmem:[%s474] sm:$0x1]
          %v944 = vlaneseq
          %v945 = vshrl.u32 %v944, 7
          %v946 = vsub.s32 0, %v945
          %v947 = vrot.slane %v942, %v946
          %v949 = vadd.f32 %v941, %v947
          %950 = vst [vmem:[#allocation11] sm:$0x3] %v949
        $region72: #{tpu_custom_call.1} parent=47 // pred_fallthru
          _
        // Predicated region
        $region73: #{tpu_custom_call.1} parent=47 // pred_check
          %p951 = pneg %p253
        $region74: #{tpu_custom_call.1} parent=47 // pred_check_branch
          %953 = sbr.rel (%p951) target = $region76
        $region75: #{tpu_custom_call.1} parent=47 // pred_region
          %s955 = ssub.s32 32, 32
          %956 = vsyncadd [#allocation5], %s955
          %s957 = sadd.s32 %s34, %s33
          %s958 = smul.addr %s957, 32
          %s959 = scalar_lea.hbm %s7, %s958
          %s961 = sshll.u32 [#allocation11], 4
          %s962 = int_to_ptr.vmem [resolvable:$true] %s961
          %964 = dma.vmem_to_hbm [thread:$0]  %s962, 32, %s959, [#allocation5]
        $region76: #{tpu_custom_call.1} parent=47 // pred_fallthru
          _
        // Predicated region
        $region77: #{tpu_custom_call.1} parent=47 // pred_check
          %p965 = pneg %p253
        $region78: #{tpu_custom_call.1} parent=47 // pred_check_branch
          %967 = sbr.rel (%p965) target = $region80
        $region79: #{tpu_custom_call.1} parent=47 // pred_region
          %968 = dma.done [#allocation5], 32
        $region80: #{tpu_custom_call.1} parent=47 // pred_fallthru
          _
      $region48: #{tpu_custom_call.1} parent=5 // pred_fallthru
        _
      %p969 = scmp.le.s32.totalorder 2, %s23
      // Predicated region
      $region81: #{tpu_custom_call.1} parent=5 // pred_check
        %p970 = pneg %p969
      $region82: #{tpu_custom_call.1} parent=5 // pred_check_branch
        %972 = sbr.rel (%p970) target = $region84
      $region83: #{tpu_custom_call.1} parent=5 // pred_region
        %s973 = ssub.s32 %s23, 2
      $region84: #{tpu_custom_call.1} parent=5 // pred_fallthru
        _
    $region6: #{tpu_custom_call.1} parent=1 // loop_footer
      %s27 = sadd.s32 1, %s23
    $region7: #{tpu_custom_call.1} parent=1 // loop_footer_branch
      %22 = sbr.rel target = $region3
    $region8: #{tpu_custom_call.1} parent=1 // loop_exit
      _
    %974 = vsyncpa [#allocation4], 1
    %s975 = scalar_lea.sflag [#allocation4], 1
    %976 = vsyncpa %s975, 1
    %977 = vsyncpa [#allocation7], 1
    %s978 = scalar_lea.sflag [#allocation7], 1
    %979 = vsyncpa %s978, 1
    %980 = vsyncpa [#allocation10], 1
    %s981 = scalar_lea.sflag [#allocation10], 1
    %982 = vsyncpa %s981, 1
    %983 = vsyncpa [#allocation5], 1
    %s984 = scalar_lea.sflag [#allocation5], 1
    %985 = vsyncpa %s984, 1

</llo_original>
